<compile_context>
chip_gen: v7x
topology: tpu7x:2x2x1
jax: 0.10.0
libtpu: 0.0.40
codegen_flags: <defaults>
</compile_context>

<pallas_src>
import functools
import math

import jax
import jax.numpy as jnp
from jax.experimental import pallas as pl
from jax.experimental.pallas import tpu as pltpu


def _round_up(a: int, b: int) -> int:
    return ((a + b - 1) // b) * b


def _eloc_kernel(xT_ref, w1_ref, w1t_ref, b1_ref, w2_ref, c_ref, out_ref, *,
                 inv_two_sigma_sq, gauss_const):
    xT = xT_ref[...]          # (N, TB)   particles x walkers
    w1 = w1_ref[...]          # (H, N)
    w1t = w1t_ref[...]        # (N, H)    == W1^T            (precomputed)
    b1 = b1_ref[...]          # (H, 1)
    w2 = w2_ref[...]          # (H, 1)
    c = c_ref[...]            # (1, H)    == w2 * sum_i W1^2 (precomputed)

    # ---- wavefunction hidden layer (walkers on lanes) ---------------------------
    z = jnp.dot(w1, xT, preferred_element_type=jnp.float32) + b1    # (H, TB)
    t = jnp.tanh(z)                                                  # tanh(z)
    u = 1.0 - t * t                                                  # sech^2(z)
    w2u = w2 * u                                                     # (H, TB)
    tu = t * u                                                       # (H, TB)

    # ---- kinetic term: closed-form grad / Laplacian -----------------------------
    g = jnp.dot(w1t, w2u, preferred_element_type=jnp.float32)        # (N, TB)
    # lap = -2 * sum_h (s1*w2)[h] * (t*u)[h]  ->  -0.5*lap on the MXU:
    neg_half_lap = jnp.dot(c, tu, preferred_element_type=jnp.float32)  # (1, TB)

    # ---- pairwise Gaussian interaction via sublane rolls (k <-> N-k symmetry) ---
    # sum over unordered pairs {i,j} of exp(-(x_i-x_j)^2/(2 s^2)) equals
    #   sum_{k=1}^{floor((N-1)/2)} S_k  +  0.5 * S_{N/2}  (last term only if N even)
    # where S_k = sum_i exp(-(x_i - x_{(i-k)%N})^2 / (2 s^2)).
    n = xT.shape[0]
    acc = jnp.zeros_like(xT)                                         # (N, TB)
    for k in range(1, (n - 1) // 2 + 1):
        d = xT - pltpu.roll(xT, shift=k, axis=0)
        acc = acc + jnp.exp(-(d * d) * inv_two_sigma_sq)
    if n % 2 == 0:
        d = xT - pltpu.roll(xT, shift=n // 2, axis=0)
        acc = acc + 0.5 * jnp.exp(-(d * d) * inv_two_sigma_sq)

    # ---- single fused axis-0 reduction: pot + (-0.5|grad|^2) + interaction -------
    fused = 0.5 * (xT * xT) - 0.5 * (g * g) + gauss_const * acc      # (N, TB)
    out_ref[...] = neg_half_lap + jnp.sum(fused, axis=0, keepdims=True)


def local_energy_pallas(x, w1, b1, w2, *, V0, sigma0, max_tile=4096):
    """x: (B, N) f32; w1: (H, N); b1: (H,); w2: (H,).  Returns (B,) local energies."""
    x = x.astype(jnp.float32)
    w1 = w1.astype(jnp.float32)
    B, N = x.shape
    H = w1.shape[0]

    gauss_const = V0 / (math.sqrt(2.0 * math.pi) * sigma0)
    inv_two_sigma_sq = 1.0 / (2.0 * sigma0 * sigma0)

    # ---- batch tile selection ---------------------------------------------------
    # lanes: multiple of 128; keep >= 2 grid steps when the batch has at least two
    # 128-lane groups (so both v7x TensorCores get work), otherwise one fat tile.
    Bp128 = _round_up(B, 128)
    if Bp128 >= 256:
        TB = min(max_tile, _round_up(Bp128 // 2, 128))
    else:
        TB = 128
    Bp = _round_up(B, TB)

    # walkers -> lanes
    xT = x.T                                                         # (N, B)
    if Bp != B:
        xT = jnp.pad(xT, ((0, 0), (0, Bp - B)))                      # (N, Bp)

    # weight-only precomputation (hoisted out of the kernel)
    w1t = w1.T                                                       # (N, H)
    b1c = b1.reshape(H, 1).astype(jnp.float32)
    w2c = w2.reshape(H, 1).astype(jnp.float32)
    s1 = jnp.sum(w1 * w1, axis=-1)                                   # (H,)
    crow = (w2.astype(jnp.float32) * s1).reshape(1, H)               # (1, H)

    kernel = functools.partial(_eloc_kernel,
                               inv_two_sigma_sq=float(inv_two_sigma_sq),
                               gauss_const=float(gauss_const))

    n_exp_rolls = (N - 1) // 2 + (1 if N % 2 == 0 else 0)
    cost = pl.CostEstimate(
        flops=4 * Bp * H * N + 2 * Bp * H + 10 * Bp * N,
        transcendentals=Bp * (H + N * n_exp_rolls),
        bytes_accessed=4 * (Bp * N + 2 * H * N + 3 * H + Bp),
    )

    out = pl.pallas_call(
        kernel,
        out_shape=jax.ShapeDtypeStruct((1, Bp), jnp.float32),
        grid=(Bp // TB,),
        in_specs=[
            pl.BlockSpec((N, TB), lambda i: (0, i)),   # x tile (streamed)
            pl.BlockSpec((H, N), lambda i: (0, 0)),    # W1            (resident)
            pl.BlockSpec((N, H), lambda i: (0, 0)),    # W1^T          (resident)
            pl.BlockSpec((H, 1), lambda i: (0, 0)),    # b1            (resident)
            pl.BlockSpec((H, 1), lambda i: (0, 0)),    # w2            (resident)
            pl.BlockSpec((1, H), lambda i: (0, 0)),    # w2*sum W1^2   (resident)
        ],
        out_specs=pl.BlockSpec((1, TB), lambda i: (0, i)),           # lane-dense
        compiler_params=pltpu.CompilerParams(
            dimension_semantics=("parallel",)),
        cost_estimate=cost,
    )(xT, w1, w1t, b1c, w2c, crow)

    return out[0, :B]


# --------------------------- pure-JAX reference (for verification) ------------------
def _net_y(w1, b1, w2, xvec):
    return jnp.sum(w2 * jnp.tanh(w1 @ xvec + b1))


def local_energy_ref(x, w1, b1, w2, *, V0, sigma0):
    gauss_const = V0 / (math.sqrt(2.0 * math.pi) * sigma0)

    def per_walker(xv):
        yfn = lambda v: _net_y(w1, b1, w2, v)
        g = jax.grad(yfn)(xv)
        lap = jnp.trace(jax.hessian(yfn)(xv))
        kin = -0.5 * (lap + jnp.sum(g * g))
        pot = 0.5 * jnp.sum(xv * xv)
        diff = xv[None, :] - xv[:, None]
        gm = jnp.exp(-(diff ** 2) / (2.0 * sigma0 ** 2))
        inter = gauss_const * jnp.sum(jnp.triu(gm, k=1))
        return kin + pot + inter

    return jax.vmap(per_walker)(x)


if __name__ == "__main__":
    B, N, H = 500, 8, 32        # walkers, particles per walker, hidden width
    V0, sigma0 = 2.0, 0.5

    key = jax.random.PRNGKey(0)
    kx, k1, kb, k2 = jax.random.split(key, 4)
    x = jax.random.normal(kx, (B, N), dtype=jnp.float32)
    w1 = 0.3 * jax.random.normal(k1, (H, N), dtype=jnp.float32)
    b1 = 0.1 * jax.random.normal(kb, (H,), dtype=jnp.float32)
    w2 = 0.3 * jax.random.normal(k2, (H,), dtype=jnp.float32)

    # B=500 -> TB=256, Bp=512, grid=(2,): exercises tiling, padding and the
    # even-N half-weighted k=N/2 roll in the interaction.
    eloc = local_energy_pallas(x, w1, b1, w2, V0=V0, sigma0=sigma0)
    jax.block_until_ready(eloc)

    eloc_ref = local_energy_ref(x, w1, b1, w2, V0=V0, sigma0=sigma0)
    assert eloc.shape == (B,)
    assert jnp.allclose(eloc, eloc_ref, atol=1e-3, rtol=1e-4), (eloc, eloc_ref)

    print("KERNEL_OK")
</pallas_src>

<mosaic_0001>
module attributes {stable_mosaic.version = 11 : i64} {
  func.func @_eloc_kernel(%arg0: i32, %arg1: memref<8x256xf32, #tpu.memory_space<vmem>>, %arg2: memref<32x8xf32, #tpu.memory_space<vmem>>, %arg3: memref<8x32xf32, #tpu.memory_space<vmem>>, %arg4: memref<32x1xf32, #tpu.memory_space<vmem>>, %arg5: memref<32x1xf32, #tpu.memory_space<vmem>>, %arg6: memref<1x32xf32, #tpu.memory_space<vmem>>, %arg7: memref<1x256xf32, #tpu.memory_space<vmem>>) attributes {dimension_semantics = [#tpu.dimension_semantics<parallel>], iteration_bounds = array<i64: 2>, scalar_prefetch = 0 : i64, scratch_operands = 0 : i64, tpu.core_type = #tpu.core_type<tc>, window_params = [{transform_indices = @transform_0, window_bounds = array<i64: 8, 256>}, {pipeline_mode = #tpu.pipeline_mode<synchronous>, transform_indices = @transform_1, window_bounds = array<i64: 32, 8>}, {pipeline_mode = #tpu.pipeline_mode<synchronous>, transform_indices = @transform_2, window_bounds = array<i64: 8, 32>}, {pipeline_mode = #tpu.pipeline_mode<synchronous>, transform_indices = @transform_3, window_bounds = array<i64: 32, 1>}, {pipeline_mode = #tpu.pipeline_mode<synchronous>, transform_indices = @transform_4, window_bounds = array<i64: 32, 1>}, {pipeline_mode = #tpu.pipeline_mode<synchronous>, transform_indices = @transform_5, window_bounds = array<i64: 1, 32>}, {transform_indices = @transform_6, window_bounds = array<i64: 1, 256>}]} {
    %c0 = arith.constant 0 : index
    %c0_0 = arith.constant 0 : index
    %0 = vector.load %arg1[%c0, %c0_0] : memref<8x256xf32, #tpu.memory_space<vmem>>, vector<8x256xf32>
    %c0_1 = arith.constant 0 : index
    %c0_2 = arith.constant 0 : index
    %1 = vector.load %arg2[%c0_1, %c0_2] : memref<32x8xf32, #tpu.memory_space<vmem>>, vector<32x8xf32>
    %c0_3 = arith.constant 0 : index
    %c0_4 = arith.constant 0 : index
    %2 = vector.load %arg3[%c0_3, %c0_4] : memref<8x32xf32, #tpu.memory_space<vmem>>, vector<8x32xf32>
    %c0_5 = arith.constant 0 : index
    %c0_6 = arith.constant 0 : index
    %3 = vector.load %arg4[%c0_5, %c0_6] : memref<32x1xf32, #tpu.memory_space<vmem>>, vector<32x1xf32>
    %c0_7 = arith.constant 0 : index
    %c0_8 = arith.constant 0 : index
    %4 = vector.load %arg5[%c0_7, %c0_8] : memref<32x1xf32, #tpu.memory_space<vmem>>, vector<32x1xf32>
    %c0_9 = arith.constant 0 : index
    %c0_10 = arith.constant 0 : index
    %5 = vector.load %arg6[%c0_9, %c0_10] : memref<1x32xf32, #tpu.memory_space<vmem>>, vector<1x32xf32>
    %cst = arith.constant dense<0.000000e+00> : vector<32x256xf32>
    %6 = tpu.matmul %1, %0, %cst {dimension_numbers = #tpu.dot_dimension_numbers<[1], [0], [0], [1], [0, 0, 1, 1], [], []>} : vector<32x8xf32>, vector<8x256xf32>, vector<32x256xf32> -> vector<32x256xf32>
    %7 = vector.broadcast %3 : vector<32x1xf32> to vector<32x256xf32>
    %8 = arith.addf %6, %7 : vector<32x256xf32>
    %9 = math.tanh %8 : vector<32x256xf32>
    %10 = arith.mulf %9, %9 : vector<32x256xf32>
    %cst_11 = arith.constant 1.000000e+00 : f32
    %11 = vector.broadcast %cst_11 : f32 to vector<32x256xf32>
    %12 = arith.subf %11, %10 : vector<32x256xf32>
    %13 = vector.broadcast %4 : vector<32x1xf32> to vector<32x256xf32>
    %14 = arith.mulf %13, %12 : vector<32x256xf32>
    %15 = arith.mulf %9, %12 : vector<32x256xf32>
    %cst_12 = arith.constant dense<0.000000e+00> : vector<8x256xf32>
    %16 = tpu.matmul %2, %14, %cst_12 {dimension_numbers = #tpu.dot_dimension_numbers<[1], [0], [0], [1], [0, 0, 1, 1], [], []>} : vector<8x32xf32>, vector<32x256xf32>, vector<8x256xf32> -> vector<8x256xf32>
    %cst_13 = arith.constant dense<0.000000e+00> : vector<1x256xf32>
    %17 = tpu.matmul %5, %15, %cst_13 {dimension_numbers = #tpu.dot_dimension_numbers<[1], [0], [0], [1], [0, 0, 1, 1], [], []>} : vector<1x32xf32>, vector<32x256xf32>, vector<1x256xf32> -> vector<1x256xf32>
    %cst_14 = arith.constant 0.000000e+00 : f32
    %18 = vector.broadcast %cst_14 : f32 to vector<8x256xf32>
    %c1_i32 = arith.constant 1 : i32
    %19 = tpu.dynamic_rotate %0 by %c1_i32 dim 0 : vector<8x256xf32>, i32 -> vector<8x256xf32>
    %20 = arith.subf %0, %19 : vector<8x256xf32>
    %21 = arith.mulf %20, %20 : vector<8x256xf32>
    %cst_15 = arith.constant 0.000000e+00 : f32
    %22 = vector.broadcast %cst_15 : f32 to vector<8x256xf32>
    %23 = arith.subf %22, %21 : vector<8x256xf32>
    %cst_16 = arith.constant 2.000000e+00 : f32
    %24 = vector.broadcast %cst_16 : f32 to vector<8x256xf32>
    %25 = arith.mulf %23, %24 : vector<8x256xf32>
    %26 = math.exp %25 : vector<8x256xf32>
    %27 = arith.addf %18, %26 : vector<8x256xf32>
    %c2_i32 = arith.constant 2 : i32
    %28 = tpu.dynamic_rotate %0 by %c2_i32 dim 0 : vector<8x256xf32>, i32 -> vector<8x256xf32>
    %29 = arith.subf %0, %28 : vector<8x256xf32>
    %30 = arith.mulf %29, %29 : vector<8x256xf32>
    %cst_17 = arith.constant 0.000000e+00 : f32
    %31 = vector.broadcast %cst_17 : f32 to vector<8x256xf32>
    %32 = arith.subf %31, %30 : vector<8x256xf32>
    %cst_18 = arith.constant 2.000000e+00 : f32
    %33 = vector.broadcast %cst_18 : f32 to vector<8x256xf32>
    %34 = arith.mulf %32, %33 : vector<8x256xf32>
    %35 = math.exp %34 : vector<8x256xf32>
    %36 = arith.addf %27, %35 : vector<8x256xf32>
    %c3_i32 = arith.constant 3 : i32
    %37 = tpu.dynamic_rotate %0 by %c3_i32 dim 0 : vector<8x256xf32>, i32 -> vector<8x256xf32>
    %38 = arith.subf %0, %37 : vector<8x256xf32>
    %39 = arith.mulf %38, %38 : vector<8x256xf32>
    %cst_19 = arith.constant 0.000000e+00 : f32
    %40 = vector.broadcast %cst_19 : f32 to vector<8x256xf32>
    %41 = arith.subf %40, %39 : vector<8x256xf32>
    %cst_20 = arith.constant 2.000000e+00 : f32
    %42 = vector.broadcast %cst_20 : f32 to vector<8x256xf32>
    %43 = arith.mulf %41, %42 : vector<8x256xf32>
    %44 = math.exp %43 : vector<8x256xf32>
    %45 = arith.addf %36, %44 : vector<8x256xf32>
    %c4_i32 = arith.constant 4 : i32
    %46 = tpu.dynamic_rotate %0 by %c4_i32 dim 0 : vector<8x256xf32>, i32 -> vector<8x256xf32>
    %47 = arith.subf %0, %46 : vector<8x256xf32>
    %48 = arith.mulf %47, %47 : vector<8x256xf32>
    %cst_21 = arith.constant 0.000000e+00 : f32
    %49 = vector.broadcast %cst_21 : f32 to vector<8x256xf32>
    %50 = arith.subf %49, %48 : vector<8x256xf32>
    %cst_22 = arith.constant 2.000000e+00 : f32
    %51 = vector.broadcast %cst_22 : f32 to vector<8x256xf32>
    %52 = arith.mulf %50, %51 : vector<8x256xf32>
    %53 = math.exp %52 : vector<8x256xf32>
    %cst_23 = arith.constant 5.000000e-01 : f32
    %54 = vector.broadcast %cst_23 : f32 to vector<8x256xf32>
    %55 = arith.mulf %54, %53 : vector<8x256xf32>
    %56 = arith.addf %45, %55 : vector<8x256xf32>
    %57 = arith.mulf %0, %0 : vector<8x256xf32>
    %cst_24 = arith.constant 5.000000e-01 : f32
    %58 = vector.broadcast %cst_24 : f32 to vector<8x256xf32>
    %59 = arith.mulf %58, %57 : vector<8x256xf32>
    %60 = arith.mulf %16, %16 : vector<8x256xf32>
    %cst_25 = arith.constant 5.000000e-01 : f32
    %61 = vector.broadcast %cst_25 : f32 to vector<8x256xf32>
    %62 = arith.mulf %61, %60 : vector<8x256xf32>
    %63 = arith.subf %59, %62 : vector<8x256xf32>
    %cst_26 = arith.constant 1.59576917 : f32
    %64 = vector.broadcast %cst_26 : f32 to vector<8x256xf32>
    %65 = arith.mulf %64, %56 : vector<8x256xf32>
    %66 = arith.addf %63, %65 : vector<8x256xf32>
    %cst_27 = arith.constant dense<0.000000e+00> : vector<256xf32>
    %67 = vector.multi_reduction <add>, %66, %cst_27 [0] : vector<8x256xf32> to vector<256xf32>
    %68 = vector.shape_cast %67 : vector<256xf32> to vector<1x256xf32>
    %69 = arith.addf %17, %68 : vector<1x256xf32>
    %c0_28 = arith.constant 0 : index
    %c0_29 = arith.constant 0 : index
    %70 = vector.load %arg7[%c0_28, %c0_29] : memref<1x256xf32, #tpu.memory_space<vmem>>, vector<1x256xf32>
    tpu.vector_store %arg7[%c0_28, %c0_29], %69 {strides = array<i32>} : memref<1x256xf32, #tpu.memory_space<vmem>>, vector<1x256xf32>,
    return
  }
  func.func @transform_0(%arg0: i32) -> (i32, i32) {
    %c0_i32 = arith.constant 0 : i32
    %c0_i32_0 = arith.constant 0 : i32
    return %c0_i32, %arg0 : i32, i32
  }
  func.func @transform_1(%arg0: i32) -> (i32, i32) {
    %c0_i32 = arith.constant 0 : i32
    %c0_i32_0 = arith.constant 0 : i32
    %c0_i32_1 = arith.constant 0 : i32
    return %c0_i32, %c0_i32_0 : i32, i32
  }
  func.func @transform_2(%arg0: i32) -> (i32, i32) {
    %c0_i32 = arith.constant 0 : i32
    %c0_i32_0 = arith.constant 0 : i32
    %c0_i32_1 = arith.constant 0 : i32
    return %c0_i32, %c0_i32_0 : i32, i32
  }
  func.func @transform_3(%arg0: i32) -> (i32, i32) {
    %c0_i32 = arith.constant 0 : i32
    %c0_i32_0 = arith.constant 0 : i32
    %c0_i32_1 = arith.constant 0 : i32
    return %c0_i32, %c0_i32_0 : i32, i32
  }
  func.func @transform_4(%arg0: i32) -> (i32, i32) {
    %c0_i32 = arith.constant 0 : i32
    %c0_i32_0 = arith.constant 0 : i32
    %c0_i32_1 = arith.constant 0 : i32
    return %c0_i32, %c0_i32_0 : i32, i32
  }
  func.func @transform_5(%arg0: i32) -> (i32, i32) {
    %c0_i32 = arith.constant 0 : i32
    %c0_i32_0 = arith.constant 0 : i32
    %c0_i32_1 = arith.constant 0 : i32
    return %c0_i32, %c0_i32_0 : i32, i32
  }
  func.func @transform_6(%arg0: i32) -> (i32, i32) {
    %c0_i32 = arith.constant 0 : i32
    %c0_i32_0 = arith.constant 0 : i32
    return %c0_i32, %arg0 : i32, i32
  }
}

</mosaic_0001>

<llo_original>
// kernel: tpu_custom_call.1
$region0: #{tpu_custom_call.1}
  #allocation0 [shape = 'u32[]', space=smem, size = 0x4, offset = 0x4, fixed_abs, tag = 'smem constant byte address 0x4 - core index']
  #allocation1 [shape = 'u32[144,128]{1,0:T(1,128)}', space=vmem, size = 0x12000, scoped, tag = 'internal scratch']
  %s0 = inlined_call_operand.vmem [shape: f32[8,512], index: 0, kind: input, shape index: {}]
  %s1 = inlined_call_operand.vmem [shape: f32[32,8], index: 1, kind: input, shape index: {}]
  %s2 = inlined_call_operand.vmem [shape: f32[8,32], index: 2, kind: input, shape index: {}]
  %s3 = inlined_call_operand.vmem [shape: f32[32,1], index: 3, kind: input, shape index: {}]
  %s4 = inlined_call_operand.vmem [shape: f32[32,1], index: 4, kind: input, shape index: {}]
  %s5 = inlined_call_operand.vmem [shape: f32[1,32], index: 5, kind: input, shape index: {}]
  %s6 = inlined_call_operand.hbm [shape: f32[1,512], index: 6, kind: output, shape index: {}]
  %s7 = sld [smem:[#allocation0]]
  $region57: #{tpu_custom_call.1} parent=0
    _
  %s9 = ssub.s32 1, %s7
  %s10 = scalar_select 0, %s9, %s7
  $region1: #{tpu_custom_call.1} parent=0
    #allocation2 [shape = 'u8[2048]{0}', space=vmem, size = 0x800, scoped, tag = 'output window, operand 0']
    #allocation3 [shape = 's32[2]{0}', space=sflag, size = 0x8, scoped, tag = 'scoped memory for tpu_custom_call.1']
    %11 = vsyncpa [#allocation3], 0
    %s12 = scalar_lea.sflag [#allocation3], 1
    %13 = vsyncpa %s12, 0
    loop: start=0, step=1, limit=4
    $region2: #{tpu_custom_call.1} parent=1 // loop_pre_header
      _
    $region3: #{tpu_custom_call.1} parent=1 // loop_header
      %s15 = sphi 0, %s19
      %p16 = scmp.ge.s32.totalorder %s15, 4
      %s25 = sphi 0, %s27
      %s28 = sphi 0, %s25
      %s29 = sphi 0, %s28
      %s45 = sphi 0, %s29
      %s49 = sphi 0, %s49
      %s51 = sphi 0, %s49
      %s52 = sphi 0, %s51
      %s66 = sphi 0, %s52
      %s70 = sphi 0, %s70
      %s72 = sphi 0, %s70
      %s73 = sphi 0, %s72
      %s87 = sphi 0, %s73
      %s91 = sphi 0, %s91
      %s93 = sphi 0, %s91
      %s94 = sphi 0, %s93
      %s108 = sphi 0, %s94
      %s112 = sphi 0, %s112
      %s114 = sphi 0, %s112
      %s115 = sphi 0, %s114
      %s129 = sphi 0, %s115
      %s133 = sphi 0, %s133
      %s135 = sphi 0, %s133
      %s136 = sphi 0, %s135
      %s150 = sphi 0, %s136
      %s156 = sphi 0, %s158
      %s159 = sphi 0, %s156
      %s160 = sphi 0, %s159
      %s176 = sphi 0, %s160
    $region4: #{tpu_custom_call.1} parent=1 // loop_header_branch
      %18 = sbr.rel (%p16) target = $region8
    $region5: #{tpu_custom_call.1} parent=1 // loop_body
      %s20 = ssub.s32 %s15, 1
      %s21 = ssub.s32 %s15, 2
      %s22 = sadd.s32 %s15, 1
      %s23 = ssub.s32 %s15, %s22
      %p24 = scmp.eq.s32.totalorder %s23, 0
      %s26 = sadd.s32 %s25, 1
      %s27 = scalar_select %p24, %s25, %s26
      %p30 = pneg %p24
      %p31 = scmp.eq.s32.totalorder %s15, 1
      %p32 = por %p30, %p31
      %p33 = scmp.ne.s32.totalorder %s25, %s28
      %p34 = scmp.eq.s32.totalorder %s15, 0
      %p35 = por %p33, %p34
      %p36 = scmp.ne.s32.totalorder %s25, %s28
      %p37 = scmp.eq.s32.totalorder %s20, 1
      %p38 = por %p36, %p37
      %p39 = scmp.ne.s32.totalorder %s28, %s29
      %p40 = scmp.eq.s32.totalorder %s20, 0
      %p41 = por %p39, %p40
      %p42 = scmp.ne.s32.totalorder %s28, %s29
      %p43 = scmp.eq.s32.totalorder %s21, 1
      %p44 = por %p42, %p43
      %p46 = scmp.ne.s32.totalorder %s29, %s45
      %p47 = scmp.eq.s32.totalorder %s21, 0
      %p48 = por %p46, %p47
      %s50 = sadd.s32 %s49, 1
      %p53 = scmp.eq.s32.totalorder %s15, 1
      %p54 = scmp.ne.s32.totalorder %s49, %s51
      %p55 = scmp.eq.s32.totalorder %s15, 0
      %p56 = por %p54, %p55
      %p57 = scmp.ne.s32.totalorder %s49, %s51
      %p58 = scmp.eq.s32.totalorder %s20, 1
      %p59 = por %p57, %p58
      %p60 = scmp.ne.s32.totalorder %s51, %s52
      %p61 = scmp.eq.s32.totalorder %s20, 0
      %p62 = por %p60, %p61
      %p63 = scmp.ne.s32.totalorder %s51, %s52
      %p64 = scmp.eq.s32.totalorder %s21, 1
      %p65 = por %p63, %p64
      %p67 = scmp.ne.s32.totalorder %s52, %s66
      %p68 = scmp.eq.s32.totalorder %s21, 0
      %p69 = por %p67, %p68
      %s71 = sadd.s32 %s70, 1
      %p74 = scmp.eq.s32.totalorder %s15, 1
      %p75 = scmp.ne.s32.totalorder %s70, %s72
      %p76 = scmp.eq.s32.totalorder %s15, 0
      %p77 = por %p75, %p76
      %p78 = scmp.ne.s32.totalorder %s70, %s72
      %p79 = scmp.eq.s32.totalorder %s20, 1
      %p80 = por %p78, %p79
      %p81 = scmp.ne.s32.totalorder %s72, %s73
      %p82 = scmp.eq.s32.totalorder %s20, 0
      %p83 = por %p81, %p82
      %p84 = scmp.ne.s32.totalorder %s72, %s73
      %p85 = scmp.eq.s32.totalorder %s21, 1
      %p86 = por %p84, %p85
      %p88 = scmp.ne.s32.totalorder %s73, %s87
      %p89 = scmp.eq.s32.totalorder %s21, 0
      %p90 = por %p88, %p89
      %s92 = sadd.s32 %s91, 1
      %p95 = scmp.eq.s32.totalorder %s15, 1
      %p96 = scmp.ne.s32.totalorder %s91, %s93
      %p97 = scmp.eq.s32.totalorder %s15, 0
      %p98 = por %p96, %p97
      %p99 = scmp.ne.s32.totalorder %s91, %s93
      %p100 = scmp.eq.s32.totalorder %s20, 1
      %p101 = por %p99, %p100
      %p102 = scmp.ne.s32.totalorder %s93, %s94
      %p103 = scmp.eq.s32.totalorder %s20, 0
      %p104 = por %p102, %p103
      %p105 = scmp.ne.s32.totalorder %s93, %s94
      %p106 = scmp.eq.s32.totalorder %s21, 1
      %p107 = por %p105, %p106
      %p109 = scmp.ne.s32.totalorder %s94, %s108
      %p110 = scmp.eq.s32.totalorder %s21, 0
      %p111 = por %p109, %p110
      %s113 = sadd.s32 %s112, 1
      %p116 = scmp.eq.s32.totalorder %s15, 1
      %p117 = scmp.ne.s32.totalorder %s112, %s114
      %p118 = scmp.eq.s32.totalorder %s15, 0
      %p119 = por %p117, %p118
      %p120 = scmp.ne.s32.totalorder %s112, %s114
      %p121 = scmp.eq.s32.totalorder %s20, 1
      %p122 = por %p120, %p121
      %p123 = scmp.ne.s32.totalorder %s114, %s115
      %p124 = scmp.eq.s32.totalorder %s20, 0
      %p125 = por %p123, %p124
      %p126 = scmp.ne.s32.totalorder %s114, %s115
      %p127 = scmp.eq.s32.totalorder %s21, 1
      %p128 = por %p126, %p127
      %p130 = scmp.ne.s32.totalorder %s115, %s129
      %p131 = scmp.eq.s32.totalorder %s21, 0
      %p132 = por %p130, %p131
      %s134 = sadd.s32 %s133, 1
      %p137 = scmp.eq.s32.totalorder %s15, 1
      %p138 = scmp.ne.s32.totalorder %s133, %s135
      %p139 = scmp.eq.s32.totalorder %s15, 0
      %p140 = por %p138, %p139
      %p141 = scmp.ne.s32.totalorder %s133, %s135
      %p142 = scmp.eq.s32.totalorder %s20, 1
      %p143 = por %p141, %p142
      %p144 = scmp.ne.s32.totalorder %s135, %s136
      %p145 = scmp.eq.s32.totalorder %s20, 0
      %p146 = por %p144, %p145
      %p147 = scmp.ne.s32.totalorder %s135, %s136
      %p148 = scmp.eq.s32.totalorder %s21, 1
      %p149 = por %p147, %p148
      %p151 = scmp.ne.s32.totalorder %s136, %s150
      %p152 = scmp.eq.s32.totalorder %s21, 0
      %p153 = por %p151, %p152
      %s154 = ssub.s32 %s15, %s22
      %p155 = scmp.eq.s32.totalorder %s154, 0
      %s157 = sadd.s32 %s156, 1
      %s158 = scalar_select %p155, %s156, %s157
      %p161 = pneg %p155
      %p162 = scmp.eq.s32.totalorder %s15, 1
      %p163 = por %p161, %p162
      %p164 = scmp.ne.s32.totalorder %s156, %s159
      %p165 = scmp.eq.s32.totalorder %s15, 0
      %p166 = por %p164, %p165
      %p167 = scmp.ne.s32.totalorder %s156, %s159
      %p168 = scmp.eq.s32.totalorder %s20, 1
      %p169 = por %p167, %p168
      %p170 = scmp.ne.s32.totalorder %s159, %s160
      %p171 = scmp.eq.s32.totalorder %s20, 0
      %p172 = por %p170, %p171
      %p173 = scmp.ne.s32.totalorder %s159, %s160
      %p174 = scmp.eq.s32.totalorder %s21, 1
      %p175 = por %p173, %p174
      %p177 = scmp.ne.s32.totalorder %s160, %s176
      %p178 = scmp.eq.s32.totalorder %s21, 0
      %p179 = por %p177, %p178
      %p180 = scmp.le.s32.totalorder 1, %s15
      %p181 = scmp.lt.s32.totalorder %s15, 3
      %p182 = pnand %p180, %p181
      %p183 = pneg %p182
      // Predicated region
      $region9: #{tpu_custom_call.1} parent=5 // pred_check
        _
      $region10: #{tpu_custom_call.1} parent=5 // pred_check_branch
        %185 = sbr.rel (%p182) target = $region12
      $region11: #{tpu_custom_call.1} parent=5 // pred_region
        %s186 = ssub.s32 %s15, 1
        // Predicated region
        $region13: #{tpu_custom_call.1} parent=11 // pred_check
          %p187 = pneg %p62
        $region14: #{tpu_custom_call.1} parent=11 // pred_check_branch
          %189 = sbr.rel (%p187) target = $region16
        $region15: #{tpu_custom_call.1} parent=11 // pred_region
          _
        $region16: #{tpu_custom_call.1} parent=11 // pred_fallthru
          _
        // Predicated region
        $region17: #{tpu_custom_call.1} parent=11 // pred_check
          %p190 = pneg %p83
        $region18: #{tpu_custom_call.1} parent=11 // pred_check_branch
          %192 = sbr.rel (%p190) target = $region20
        $region19: #{tpu_custom_call.1} parent=11 // pred_region
          _
        $region20: #{tpu_custom_call.1} parent=11 // pred_fallthru
          _
        // Predicated region
        $region21: #{tpu_custom_call.1} parent=11 // pred_check
          %p193 = pneg %p104
        $region22: #{tpu_custom_call.1} parent=11 // pred_check_branch
          %195 = sbr.rel (%p193) target = $region24
        $region23: #{tpu_custom_call.1} parent=11 // pred_region
          _
        $region24: #{tpu_custom_call.1} parent=11 // pred_fallthru
          _
        // Predicated region
        $region25: #{tpu_custom_call.1} parent=11 // pred_check
          %p196 = pneg %p125
        $region26: #{tpu_custom_call.1} parent=11 // pred_check_branch
          %198 = sbr.rel (%p196) target = $region28
        $region27: #{tpu_custom_call.1} parent=11 // pred_region
          _
        $region28: #{tpu_custom_call.1} parent=11 // pred_fallthru
          _
        // Predicated region
        $region29: #{tpu_custom_call.1} parent=11 // pred_check
          %p199 = pneg %p146
        $region30: #{tpu_custom_call.1} parent=11 // pred_check_branch
          %201 = sbr.rel (%p199) target = $region32
        $region31: #{tpu_custom_call.1} parent=11 // pred_region
          _
        $region32: #{tpu_custom_call.1} parent=11 // pred_fallthru
          _
      $region12: #{tpu_custom_call.1} parent=5 // pred_fallthru
        _
      %p202 = scmp.lt.s32.totalorder %s15, 2
      // Predicated region
      $region33: #{tpu_custom_call.1} parent=5 // pred_check
        %p203 = pneg %p202
      $region34: #{tpu_custom_call.1} parent=5 // pred_check_branch
        %205 = sbr.rel (%p203) target = $region36
      $region35: #{tpu_custom_call.1} parent=5 // pred_region
        // Predicated region
        $region37: #{tpu_custom_call.1} parent=35 // pred_check
          %p206 = pneg %p35
        $region38: #{tpu_custom_call.1} parent=35 // pred_check_branch
          %208 = sbr.rel (%p206) target = $region40
        $region39: #{tpu_custom_call.1} parent=35 // pred_region
          %s209 = smul.u32 2, %s15
          %p210 = scmp.lt.s32.totalorder %s209, 3
          %s211 = scalar_select %p210, %s209, 3
          %s212 = smul.addr %s211, 8
          %s213 = scalar_lea.vmem %s0, %s212
          %s214 = smul.u32 2, %s15
        $region40: #{tpu_custom_call.1} parent=35 // pred_fallthru
          _
      $region36: #{tpu_custom_call.1} parent=5 // pred_fallthru
        _
      %p215 = scmp.le.s32.totalorder 1, %s15
      %p216 = scmp.lt.s32.totalorder %s15, 3
      %p217 = pnand %p215, %p216
      %p218 = pneg %p217
      // Predicated region
      $region41: #{tpu_custom_call.1} parent=5 // pred_check
        _
      $region42: #{tpu_custom_call.1} parent=5 // pred_check_branch
        %220 = sbr.rel (%p217) target = $region44
      $region43: #{tpu_custom_call.1} parent=5 // pred_region
        %s221 = ssub.s32 %s15, 1
        %s222 = smul.u32 2, %s20
        %p223 = scmp.lt.s32.totalorder %s222, 3
        %s224 = scalar_select %p223, %s222, 3
        %s225 = smul.addr %s224, 8
        %s226 = scalar_lea.vmem %s0, %s225
        %p227 = pneg %p41
        %p228 = pneg %p38
        %p229 = pneg %p62
        %p230 = pneg %p59
        %p231 = pneg %p83
        %p232 = pneg %p80
        %p233 = pneg %p104
        %p234 = pneg %p101
        %p235 = pneg %p125
        %p236 = pneg %p122
        %p237 = pneg %p146
        %p238 = pneg %p143
        %p239 = pneg %p172
        %p240 = pneg %p169
        %s241 = sand.u32 %s159, 1
        %s242 = scalar_lea.sflag [#allocation3], %s241
        %s243 = sand.u32 %s159, 1
        %s244 = smul.addr %s243, 2
        %s245 = scalar_lea.vmem [#allocation2], %s244
        %s246 = smul.u32 2, %s20
        %p247 = scmp.lt.s32.totalorder %s246, 3
        %s248 = scalar_select %p247, %s246, 3
        %s249 = smul.addr %s248, 8
        %s250 = scalar_lea.vmem %s0, %s249
        %s251 = smul.u32 2, %s20
        %s252 = smul.u32 2, %s20
        %v253 = vld [vmem:[%s250] sm:$0xff]
        %v254 = vld [vmem:[%s250 + $0x8] sm:$0xff]
        %v255 = vld [vmem:[%s1] sm:$0xff]
        %v256 = vld [vmem:[%s1 + $0x8] sm:$0xff]
        %v257 = vld [vmem:[%s1 + $0x10] sm:$0xff]
        %v258 = vld [vmem:[%s1 + $0x18] sm:$0xff]
        %v259 = vld [vmem:[%s2] sm:$0xff]
        %v260 = vld [vmem:[%s3] sm:$0xff]
        %v261 = vld [vmem:[%s3 + $0x8] sm:$0xff]
        %v262 = vld [vmem:[%s3 + $0x10] sm:$0xff]
        %v263 = vld [vmem:[%s3 + $0x18] sm:$0xff]
        %v264 = vld [vmem:[%s4] sm:$0xff]
        %v265 = vld [vmem:[%s4 + $0x8] sm:$0xff]
        %v266 = vld [vmem:[%s4 + $0x10] sm:$0xff]
        %v267 = vld [vmem:[%s4 + $0x18] sm:$0xff]
        %v268 = vld [vmem:[%s5] sm:$0x1]
        %270 = vset.pattern.permute.xlu0 0
        %271 = vperm.xlu0 %270, %v260
        %v272 = vpop.permute.xlu0 %271
        %275 = vset.pattern.permute.xlu0 0
        %276 = vperm.xlu0 %275, %v261
        %v277 = vpop.permute.xlu0 %276
        %280 = vset.pattern.permute.xlu0 0
        %281 = vperm.xlu0 %280, %v262
        %v282 = vpop.permute.xlu0 %281
        %285 = vset.pattern.permute.xlu0 0
        %286 = vperm.xlu0 %285, %v263
        %v287 = vpop.permute.xlu0 %286
        %vm289 = vcmask 64512
        %v291 = vsel %vm289, %v255, 0
        %v294 = vsel %vm289, %v256, 0
        %v297 = vsel %vm289, %v257, 0
        %v300 = vsel %vm289, %v258, 0
        %302 = vmatprep.subr.mxu0 %v254
        %303 = vmatpush1.msra.mxu0 %v253
        %304 = vmatprep.subr.mxu0 0.0
        %305 = vmatpush1.msra.mxu0 0.0
        %306 = vmatprep.subr.mxu0 0.0
        %307 = vmatpush1.msra.mxu0 0.0
        %308 = vmatprep.subr.mxu0 0.0
        %309 = vmatpush1.msra.mxu0 0.0
        %310 = vmatprep.subr.mxu0 0.0
        %311 = vmatpush1.msra.mxu0 0.0
        %312 = vmatprep.subr.mxu0 0.0
        %313 = vmatpush1.msra.mxu0 0.0
        %314 = vmatprep.subr.mxu0 0.0
        %315 = vmatpush1.msra.mxu0 0.0
        %316 = vmatprep.subr.mxu0 0.0
        %317 = vmatpush1.msra.mxu0 0.0
        %318 = vmatprep.subr.mxu0 0.0
        %319 = vmatpush1.msra.mxu0 0.0
        %320 = vmatprep.subr.mxu0 0.0
        %321 = vmatpush1.msra.mxu0 0.0
        %322 = vmatprep.subr.mxu0 0.0
        %323 = vmatpush1.msra.mxu0 0.0
        %324 = vmatprep.subr.mxu0 0.0
        %325 = vmatpush1.msra.mxu0 0.0
        %326 = vmatprep.subr.mxu0 0.0
        %327 = vmatpush1.msra.mxu0 0.0
        %328 = vmatprep.subr.mxu0 0.0
        %329 = vmatpush1.msra.mxu0 0.0
        %330 = vmatprep.subr.mxu0 0.0
        %331 = vmatpush1.msra.mxu0 0.0
        %332 = vmatprep.subr.mxu0 0.0
        %333 = vmatpush1.msra.mxu0 0.0
        %334 = vmatprep.subr.mxu0 0.0
        %335 = vmatpush1.msra.mxu0 0.0
        %336 = vmatprep.subr.mxu0 0.0
        %337 = vmatpush1.msra.mxu0 0.0
        %338 = vmatprep.subr.mxu0 0.0
        %339 = vmatpush1.msra.mxu0 0.0
        %340 = vmatprep.subr.mxu0 0.0
        %341 = vmatpush1.msra.mxu0 0.0
        %342 = vmatprep.subr.mxu0 0.0
        %343 = vmatpush1.msra.mxu0 0.0
        %344 = vmatprep.subr.mxu0 0.0
        %345 = vmatpush1.msra.mxu0 0.0
        %346 = vmatprep.subr.mxu0 0.0
        %347 = vmatpush1.msra.mxu0 0.0
        %348 = vmatprep.subr.mxu0 0.0
        %349 = vmatpush1.msra.mxu0 0.0
        %350 = vmatprep.subr.mxu0 0.0
        %351 = vmatpush1.msra.mxu0 0.0
        %352 = vmatprep.subr.mxu0 0.0
        %353 = vmatpush1.msra.mxu0 0.0
        %354 = vmatprep.subr.mxu0 0.0
        %355 = vmatpush1.msra.mxu0 0.0
        %356 = vmatprep.subr.mxu0 0.0
        %357 = vmatpush1.msra.mxu0 0.0
        %358 = vmatprep.subr.mxu0 0.0
        %359 = vmatpush1.msra.mxu0 0.0
        %360 = vmatprep.subr.mxu0 0.0
        %361 = vmatpush1.msra.mxu0 0.0
        %362 = vmatprep.subr.mxu0 0.0
        %363 = vmatpush1.msra.mxu0 0.0
        %364 = vmatprep.subr.mxu0 0.0
        %365 = vmatpush1.msra.mxu0 0.0
        %366 = vmatprep.mubr.f32.mxu0 0.0
        %367 = vmatmul.mubr.f32.gmra.mrb[0].mxu0 %v291
        %v368 = vpop.f32.mrb[0].mxu0
        %v369 = vadd.f32 %v272, %v368
        %v370 = vpop.f32.mrb[0].mxu0
        %v371 = vadd.f32 %v272, %v370
        %372 = vmatprep.mubr.f32.mxu0 0.0
        %373 = vmatmul.mubr.f32.gmra.mrb[0].mxu0 %v294
        %v374 = vpop.f32.mrb[0].mxu0
        %v375 = vadd.f32 %v277, %v374
        %v376 = vpop.f32.mrb[0].mxu0
        %v377 = vadd.f32 %v277, %v376
        %378 = vmatprep.mubr.f32.mxu0 0.0
        %379 = vmatmul.mubr.f32.gmra.mrb[0].mxu0 %v297
        %v380 = vpop.f32.mrb[0].mxu0
        %v381 = vadd.f32 %v282, %v380
        %v382 = vpop.f32.mrb[0].mxu0
        %v383 = vadd.f32 %v282, %v382
        %384 = vmatprep.mubr.f32.mxu0 0.0
        %385 = vmatmul.mubr.f32.gmra.mrb[0].mxu0 %v300
        %v386 = vpop.f32.mrb[0].mxu0
        %v387 = vadd.f32 %v287, %v386
        %v388 = vpop.f32.mrb[0].mxu0
        %v389 = vadd.f32 %v287, %v388
        %390 = vdwg.mxu0
        %v391 = vtanh.pop %v369
        %v392 = vtanh.pop %v371
        %v393 = vtanh.pop %v375
        %v394 = vtanh.pop %v377
        %v395 = vtanh.pop %v381
        %v396 = vtanh.pop %v383
        %v397 = vtanh.pop %v387
        %v398 = vtanh.pop %v389
        %v399 = vmul.f32 %v391, %v391
        %v400 = vmul.f32 %v392, %v392
        %v401 = vmul.f32 %v393, %v393
        %v402 = vmul.f32 %v394, %v394
        %v403 = vmul.f32 %v395, %v395
        %v404 = vmul.f32 %v396, %v396
        %v405 = vmul.f32 %v397, %v397
        %v406 = vmul.f32 %v398, %v398
        %v407 = vsub.f32 1.0, %v399
        %v408 = vsub.f32 1.0, %v400
        %v409 = vsub.f32 1.0, %v401
        %v410 = vsub.f32 1.0, %v402
        %v411 = vsub.f32 1.0, %v403
        %v412 = vsub.f32 1.0, %v404
        %v413 = vsub.f32 1.0, %v405
        %v414 = vsub.f32 1.0, %v406
        %416 = vset.pattern.permute.xlu0 0
        %417 = vperm.xlu0 %416, %v264
        %v418 = vpop.permute.xlu0 %417
        %421 = vset.pattern.permute.xlu0 0
        %422 = vperm.xlu0 %421, %v265
        %v423 = vpop.permute.xlu0 %422
        %426 = vset.pattern.permute.xlu0 0
        %427 = vperm.xlu0 %426, %v266
        %v428 = vpop.permute.xlu0 %427
        %431 = vset.pattern.permute.xlu0 0
        %432 = vperm.xlu0 %431, %v267
        %v433 = vpop.permute.xlu0 %432
        %v435 = vmul.f32 %v418, %v407
        %v436 = vmul.f32 %v418, %v408
        %v437 = vmul.f32 %v423, %v409
        %v438 = vmul.f32 %v423, %v410
        %v439 = vmul.f32 %v428, %v411
        %v440 = vmul.f32 %v428, %v412
        %v441 = vmul.f32 %v433, %v413
        %v442 = vmul.f32 %v433, %v414
        %v443 = vmul.f32 %v391, %v407
        %v444 = vmul.f32 %v392, %v408
        %v445 = vmul.f32 %v393, %v409
        %v446 = vmul.f32 %v394, %v410
        %v447 = vmul.f32 %v395, %v411
        %v448 = vmul.f32 %v396, %v412
        %v449 = vmul.f32 %v397, %v413
        %v450 = vmul.f32 %v398, %v414
        %vm451 = vcmask 261120
        %v453 = vsel %vm451, %v259, 0
        %455 = vmatprep.subr.mxu0 %v436
        %456 = vmatpush1.msra.mxu0 %v435
        %457 = vmatprep.subr.mxu0 %v438
        %458 = vmatpush1.msra.mxu0 %v437
        %459 = vmatprep.subr.mxu0 %v440
        %460 = vmatpush1.msra.mxu0 %v439
        %461 = vmatprep.subr.mxu0 %v442
        %462 = vmatpush1.msra.mxu0 %v441
        %463 = vmatprep.subr.mxu0 0.0
        %464 = vmatpush1.msra.mxu0 0.0
        %465 = vmatprep.subr.mxu0 0.0
        %466 = vmatpush1.msra.mxu0 0.0
        %467 = vmatprep.subr.mxu0 0.0
        %468 = vmatpush1.msra.mxu0 0.0
        %469 = vmatprep.subr.mxu0 0.0
        %470 = vmatpush1.msra.mxu0 0.0
        %471 = vmatprep.subr.mxu0 0.0
        %472 = vmatpush1.msra.mxu0 0.0
        %473 = vmatprep.subr.mxu0 0.0
        %474 = vmatpush1.msra.mxu0 0.0
        %475 = vmatprep.subr.mxu0 0.0
        %476 = vmatpush1.msra.mxu0 0.0
        %477 = vmatprep.subr.mxu0 0.0
        %478 = vmatpush1.msra.mxu0 0.0
        %479 = vmatprep.subr.mxu0 0.0
        %480 = vmatpush1.msra.mxu0 0.0
        %481 = vmatprep.subr.mxu0 0.0
        %482 = vmatpush1.msra.mxu0 0.0
        %483 = vmatprep.subr.mxu0 0.0
        %484 = vmatpush1.msra.mxu0 0.0
        %485 = vmatprep.subr.mxu0 0.0
        %486 = vmatpush1.msra.mxu0 0.0
        %487 = vmatprep.subr.mxu0 0.0
        %488 = vmatpush1.msra.mxu0 0.0
        %489 = vmatprep.subr.mxu0 0.0
        %490 = vmatpush1.msra.mxu0 0.0
        %491 = vmatprep.subr.mxu0 0.0
        %492 = vmatpush1.msra.mxu0 0.0
        %493 = vmatprep.subr.mxu0 0.0
        %494 = vmatpush1.msra.mxu0 0.0
        %495 = vmatprep.subr.mxu0 0.0
        %496 = vmatpush1.msra.mxu0 0.0
        %497 = vmatprep.subr.mxu0 0.0
        %498 = vmatpush1.msra.mxu0 0.0
        %499 = vmatprep.subr.mxu0 0.0
        %500 = vmatpush1.msra.mxu0 0.0
        %501 = vmatprep.subr.mxu0 0.0
        %502 = vmatpush1.msra.mxu0 0.0
        %503 = vmatprep.subr.mxu0 0.0
        %504 = vmatpush1.msra.mxu0 0.0
        %505 = vmatprep.subr.mxu0 0.0
        %506 = vmatpush1.msra.mxu0 0.0
        %507 = vmatprep.subr.mxu0 0.0
        %508 = vmatpush1.msra.mxu0 0.0
        %509 = vmatprep.subr.mxu0 0.0
        %510 = vmatpush1.msra.mxu0 0.0
        %511 = vmatprep.subr.mxu0 0.0
        %512 = vmatpush1.msra.mxu0 0.0
        %513 = vmatprep.subr.mxu0 0.0
        %514 = vmatpush1.msra.mxu0 0.0
        %515 = vmatprep.subr.mxu0 0.0
        %516 = vmatpush1.msra.mxu0 0.0
        %517 = vmatprep.subr.mxu0 0.0
        %518 = vmatpush1.msra.mxu0 0.0
        %519 = vmatprep.mubr.f32.mxu0 0.0
        %520 = vmatmul.mubr.f32.gmra.mrb[0].mxu0 %v453
        %v521 = vpop.f32.mrb[0].mxu0
        %v522 = vadd.f32 0.0, %v521
        %v523 = vpop.f32.mrb[0].mxu0
        %v524 = vadd.f32 0.0, %v523
        %525 = vdwg.mxu0
        %v526 = vrot.slane %v253, 7
        %v527 = vrot.slane %v254, 7
        %v528 = vsub.f32 %v253, %v526
        %v529 = vsub.f32 %v254, %v527
        %v530 = vmul.f32 %v528, %v528
        %v531 = vmul.f32 %v529, %v529
        %v532 = vsub.f32 0.0, %v530
        %v533 = vsub.f32 0.0, %v531
        %v534 = vmul.f32 %v532, 2.0
        %v535 = vmul.f32 %v533, 2.0
        %v536 = vmul.f32 %v534, 1.442695
        %v537 = vpow.pop %v536
        %v538 = vmul.f32 %v535, 1.442695
        %v539 = vpow.pop %v538
        %v540 = vadd.f32 %v537, 0.0
        %v541 = vadd.f32 %v539, 0.0
        %v542 = vrot.slane %v253, 6
        %v543 = vrot.slane %v254, 6
        %v544 = vsub.f32 %v253, %v542
        %v545 = vsub.f32 %v254, %v543
        %v546 = vmul.f32 %v544, %v544
        %v547 = vmul.f32 %v545, %v545
        %v548 = vsub.f32 0.0, %v546
        %v549 = vsub.f32 0.0, %v547
        %v550 = vmul.f32 %v548, 2.0
        %v551 = vmul.f32 %v549, 2.0
        %v552 = vmul.f32 %v550, 1.442695
        %v553 = vpow.pop %v552
        %v554 = vmul.f32 %v551, 1.442695
        %v555 = vpow.pop %v554
        %v556 = vadd.f32 %v540, %v553
        %v557 = vadd.f32 %v541, %v555
        %v558 = vrot.slane %v253, 5
        %v559 = vrot.slane %v254, 5
        %v560 = vsub.f32 %v253, %v558
        %v561 = vsub.f32 %v254, %v559
        %v562 = vmul.f32 %v560, %v560
        %v563 = vmul.f32 %v561, %v561
        %v564 = vsub.f32 0.0, %v562
        %v565 = vsub.f32 0.0, %v563
        %v566 = vmul.f32 %v564, 2.0
        %v567 = vmul.f32 %v565, 2.0
        %v568 = vmul.f32 %v566, 1.442695
        %v569 = vpow.pop %v568
        %v570 = vmul.f32 %v567, 1.442695
        %v571 = vpow.pop %v570
        %v572 = vadd.f32 %v556, %v569
        %v573 = vadd.f32 %v557, %v571
        %v574 = vrot.slane %v253, 4
        %v575 = vrot.slane %v254, 4
        %v576 = vsub.f32 %v253, %v574
        %v577 = vsub.f32 %v254, %v575
        %v578 = vmul.f32 %v576, %v576
        %v579 = vmul.f32 %v577, %v577
        %v580 = vsub.f32 0.0, %v578
        %v581 = vsub.f32 0.0, %v579
        %v582 = vmul.f32 %v580, 2.0
        %v583 = vmul.f32 %v581, 2.0
        %v584 = vmul.f32 %v582, 1.442695
        %v585 = vpow.pop %v584
        %v586 = vmul.f32 %v583, 1.442695
        %v587 = vpow.pop %v586
        %v588 = vmul.f32 %v585, 0.5
        %v589 = vmul.f32 %v587, 0.5
        %v590 = vadd.f32 %v572, %v588
        %v591 = vadd.f32 %v573, %v589
        %v592 = vmul.f32 %v253, %v253
        %v593 = vmul.f32 %v254, %v254
        %v594 = vmul.f32 %v592, 0.5
        %v595 = vmul.f32 %v593, 0.5
        %v596 = vmul.f32 %v522, %v522
        %v597 = vmul.f32 %v524, %v524
        %v598 = vmul.f32 %v596, 0.5
        %v599 = vmul.f32 %v597, 0.5
        %v600 = vsub.f32 %v594, %v598
        %v601 = vsub.f32 %v595, %v599
        %v602 = vmul.f32 %v590, 1.5957692
        %v603 = vmul.f32 %v591, 1.5957692
        %v604 = vadd.f32 %v600, %v602
        %v605 = vadd.f32 %v601, %v603
        %v606 = vrot.slane %v604, 4
        %v607 = vadd.f32 %v604, %v606
        %v608 = vrot.slane %v607, 2
        %v609 = vadd.f32 %v607, %v608
        %v610 = vrot.slane %v609, 1
        %v611 = vadd.f32 %v609, %v610
        %v612 = vrot.slane %v605, 4
        %v613 = vadd.f32 %v605, %v612
        %v614 = vrot.slane %v613, 2
        %v615 = vadd.f32 %v613, %v614
        %v616 = vrot.slane %v615, 1
        %v617 = vadd.f32 %v615, %v616
        %v619 = vsel %vm451, %v268, 0
        %621 = vmatprep.subr.mxu0 %v444
        %622 = vmatpush1.msra.mxu0 %v443
        %623 = vmatprep.subr.mxu0 %v446
        %624 = vmatpush1.msra.mxu0 %v445
        %625 = vmatprep.subr.mxu0 %v448
        %626 = vmatpush1.msra.mxu0 %v447
        %627 = vmatprep.subr.mxu0 %v450
        %628 = vmatpush1.msra.mxu0 %v449
        %629 = vmatprep.subr.mxu0 0.0
        %630 = vmatpush1.msra.mxu0 0.0
        %631 = vmatprep.subr.mxu0 0.0
        %632 = vmatpush1.msra.mxu0 0.0
        %633 = vmatprep.subr.mxu0 0.0
        %634 = vmatpush1.msra.mxu0 0.0
        %635 = vmatprep.subr.mxu0 0.0
        %636 = vmatpush1.msra.mxu0 0.0
        %637 = vmatprep.subr.mxu0 0.0
        %638 = vmatpush1.msra.mxu0 0.0
        %639 = vmatprep.subr.mxu0 0.0
        %640 = vmatpush1.msra.mxu0 0.0
        %641 = vmatprep.subr.mxu0 0.0
        %642 = vmatpush1.msra.mxu0 0.0
        %643 = vmatprep.subr.mxu0 0.0
        %644 = vmatpush1.msra.mxu0 0.0
        %645 = vmatprep.subr.mxu0 0.0
        %646 = vmatpush1.msra.mxu0 0.0
        %647 = vmatprep.subr.mxu0 0.0
        %648 = vmatpush1.msra.mxu0 0.0
        %649 = vmatprep.subr.mxu0 0.0
        %650 = vmatpush1.msra.mxu0 0.0
        %651 = vmatprep.subr.mxu0 0.0
        %652 = vmatpush1.msra.mxu0 0.0
        %653 = vmatprep.subr.mxu0 0.0
        %654 = vmatpush1.msra.mxu0 0.0
        %655 = vmatprep.subr.mxu0 0.0
        %656 = vmatpush1.msra.mxu0 0.0
        %657 = vmatprep.subr.mxu0 0.0
        %658 = vmatpush1.msra.mxu0 0.0
        %659 = vmatprep.subr.mxu0 0.0
        %660 = vmatpush1.msra.mxu0 0.0
        %661 = vmatprep.subr.mxu0 0.0
        %662 = vmatpush1.msra.mxu0 0.0
        %663 = vmatprep.subr.mxu0 0.0
        %664 = vmatpush1.msra.mxu0 0.0
        %665 = vmatprep.subr.mxu0 0.0
        %666 = vmatpush1.msra.mxu0 0.0
        %667 = vmatprep.subr.mxu0 0.0
        %668 = vmatpush1.msra.mxu0 0.0
        %669 = vmatprep.subr.mxu0 0.0
        %670 = vmatpush1.msra.mxu0 0.0
        %671 = vmatprep.subr.mxu0 0.0
        %672 = vmatpush1.msra.mxu0 0.0
        %673 = vmatprep.subr.mxu0 0.0
        %674 = vmatpush1.msra.mxu0 0.0
        %675 = vmatprep.subr.mxu0 0.0
        %676 = vmatpush1.msra.mxu0 0.0
        %677 = vmatprep.subr.mxu0 0.0
        %678 = vmatpush1.msra.mxu0 0.0
        %679 = vmatprep.subr.mxu0 0.0
        %680 = vmatpush1.msra.mxu0 0.0
        %681 = vmatprep.subr.mxu0 0.0
        %682 = vmatpush1.msra.mxu0 0.0
        %683 = vmatprep.subr.mxu0 0.0
        %684 = vmatpush1.msra.mxu0 0.0
        %685 = vmatprep.mubr.f32.mxu0 0.0
        %686 = vmatmul.mubr.f32.gmra.mrb[0].mxu0 %v619
        %v687 = vpop.f32.mrb[0].mxu0
        %v688 = vadd.f32 %v611, %v687
        %v689 = vpop.f32.mrb[0].mxu0
        %v690 = vadd.f32 %v617, %v689
        %691 = vdwg.mxu0
        %v694 = vcombine.low %v688, %v690
        %v696 = vunpack.c.l.s4 1966171168
        %v697 = vunpack.c.0.s8 %v696
        %v698 = vlaneseq
        %v699 = vshrl.u32 %v698, 7
        %v700 = vsub.s32 %v697, %v699
        %v701 = vrot.slane %v694, %v700
        %v703 = vunpack.c.l.s4 1966171168
        %v704 = vunpack.c.0.s8 %v703
        %v705 = vlaneseq
        %v706 = vshrl.u32 %v705, 7
        %v707 = vsub.s32 %v704, %v706
        %v708 = vrot.slane %v701, %v707
        %v710 = vlaneseq
        %vm711 = vcmp.ge.s32.totalorder %v710, 0
        %vm712 = vcmp.lt.s32.totalorder %v710, 256
        %vm713 = vmand %vm711, %vm712
        %714 = vst.msk [vmem:[%s245] sm:$0x3] %vm713, %v708
        %s715 = sand.u32 %s159, 1
        %s716 = scalar_lea.sflag [#allocation3], %s715
        %s717 = sand.u32 %s159, 1
        %s718 = smul.addr %s717, 2
        %s719 = scalar_lea.vmem [#allocation2], %s718
        // Predicated region
        $region45: #{tpu_custom_call.1} parent=43 // pred_check
          %p720 = pneg %p169
        $region46: #{tpu_custom_call.1} parent=43 // pred_check_branch
          %722 = sbr.rel (%p720) target = $region48
        $region47: #{tpu_custom_call.1} parent=43 // pred_region
          %s723 = smul.u32 2, %s20
          %s725 = ssub.s32 32, 32
          %726 = vsyncadd %s716, %s725
          %s727 = smul.addr %s723, 16
          %s728 = scalar_lea.hbm %s6, %s727
          %s730 = sshll.u32 %s719, 4
          %s731 = int_to_ptr.vmem [resolvable:$true] %s730
          %733 = dma.vmem_to_hbm [thread:$0]  %s731, 32, %s728, %s716
        $region48: #{tpu_custom_call.1} parent=43 // pred_fallthru
          _
      $region44: #{tpu_custom_call.1} parent=5 // pred_fallthru
        _
      %p734 = scmp.le.s32.totalorder 2, %s15
      // Predicated region
      $region49: #{tpu_custom_call.1} parent=5 // pred_check
        %p735 = pneg %p734
      $region50: #{tpu_custom_call.1} parent=5 // pred_check_branch
        %737 = sbr.rel (%p735) target = $region52
      $region51: #{tpu_custom_call.1} parent=5 // pred_region
        %s738 = ssub.s32 %s15, 2
        // Predicated region
        $region53: #{tpu_custom_call.1} parent=51 // pred_check
          %p739 = pneg %p175
        $region54: #{tpu_custom_call.1} parent=51 // pred_check_branch
          %741 = sbr.rel (%p739) target = $region56
        $region55: #{tpu_custom_call.1} parent=51 // pred_region
          %s742 = sand.u32 %s160, 1
          %s743 = scalar_lea.sflag [#allocation3], %s742
          %s744 = sand.u32 %s160, 1
          %s745 = smul.addr %s744, 2
          %s746 = scalar_lea.vmem [#allocation2], %s745
          %747 = dma.done %s743, 32
        $region56: #{tpu_custom_call.1} parent=51 // pred_fallthru
          _
      $region52: #{tpu_custom_call.1} parent=5 // pred_fallthru
        _
    $region6: #{tpu_custom_call.1} parent=1 // loop_footer
      %s19 = sadd.s32 1, %s15
    $region7: #{tpu_custom_call.1} parent=1 // loop_footer_branch
      %14 = sbr.rel target = $region3
    $region8: #{tpu_custom_call.1} parent=1 // loop_exit
      _
    %748 = vsyncpa [#allocation3], 1
    %s749 = scalar_lea.sflag [#allocation3], 1
    %750 = vsyncpa %s749, 1

</llo_original>
